<compile_context>
chip_gen: v5e
topology: v5e:2x2
jax: 0.10.0
libtpu: 0.0.40
codegen_flags: <defaults>
</compile_context>

<pallas_src>
import functools

import jax
import jax.numpy as jnp
from jax.experimental import pallas as pl
from jax.experimental.pallas import tpu as pltpu

REFINE_TIMES = 3  # stands in for cfg.REFINE_TIMES


def _round_up(x, m):
    return (x + m - 1) // m * m


def _refine_fused_kernel(x_ref, w_ref, b_ref, o_ref, *, r, seg):
    # x_ref: (TILE_N, dim_in)   one N-tile of the input
    # w_ref: (dim_in, r*seg)    fused weights; head i owns lanes [i*seg,(i+1)*seg)
    #                           (pad columns are exactly zero)
    # b_ref: (1, r*seg)         fused bias; pad lanes hold -1e30 (=> exp -> 0)
    # o_ref: (TILE_N, r*seg)    lane-dense per-head softmax scores
    x = x_ref[...]
    if x.dtype != w_ref.dtype:
        # dtype policy is set by the one-time-cast weights; this cast is free
        # VPU work in VMEM, never an extra HBM pass in the wrapper.
        x = x.astype(w_ref.dtype)
    # One MXU call for all heads; f32 accumulation + f32 softmax math.
    logits = jnp.dot(x, w_ref[...], preferred_element_type=jnp.float32)
    logits = logits + b_ref[...].astype(jnp.float32)

    for i in range(r):  # static unroll; r == cfg.REFINE_TIMES (tiny)
        lg = logits[:, i * seg:(i + 1) * seg]   # 128-lane aligned -> free vreg view
        m = jnp.max(lg, axis=1, keepdims=True)
        e = jnp.exp(lg - m)                     # pad lanes: exp(-1e30 - m) == 0
        s = jnp.sum(e, axis=1, keepdims=True)
        # exact reciprocal keeps the 1e-5 f32 softmax tolerance
        sm = e * pl.reciprocal(s, approx=False)
        o_ref[:, i * seg:(i + 1) * seg] = sm.astype(o_ref.dtype)  # direct per-head store


def init_params(key, dim_in, dim_out, r=REFINE_TIMES):
    # Matches PyTorch: nn.init.normal_(weight, std=0.01); bias = 0
    w = 0.01 * jax.random.normal(key, (r, dim_out, dim_in), dtype=jnp.float32)
    b = jnp.zeros((r, dim_out), dtype=jnp.float32)
    return w, b


def prepare_params(weights, biases, compute_dtype=jnp.bfloat16, pad_bias=-1e30):
    """One-time parameter layout + dtype prep (NOT in the per-call hot path).

    weights: (R, dim_out, dim_in)  -- PyTorch Linear layout
    biases:  (R, dim_out)

    Each head gets its own 128-lane-aligned segment of the fused class axis so
    the kernel's per-head slices/stores are lane-tile aligned.  Weight pad
    columns are exactly zero; pad bias entries are a large NEGATIVE FINITE
    constant so the softmax assigns them exactly zero weight (no inf-inf NaNs).
    """
    r, dim_out, dim_in = weights.shape
    seg = max(_round_up(dim_out, 128), 128)
    c_pad = r * seg
    w_f = jnp.zeros((dim_in, c_pad), jnp.float32)
    b_f = jnp.full((1, c_pad), pad_bias, jnp.float32)
    for i in range(r):
        w_f = w_f.at[:, i * seg:i * seg + dim_out].set(weights[i].T)
        b_f = b_f.at[:, i * seg:i * seg + dim_out].set(biases[i][None, :])
    # bf16 weights by default (one-time cast): the kernel is HBM-bound, so the
    # MXU runs off bf16 while all softmax math stays f32.  Bias stays f32.
    return w_f.astype(compute_dtype), b_f, seg


def _pick_tile(n, tile_n=512, min_tile=128, target_steps=8):
    """Row tile: aim for >= target_steps grid steps (v7x 2-TC sharding and
    pipeline double-buffering) while staying in [min_tile, tile_n] rows
    (HBM-roofline sweet spot), and never larger than round_up(n, 8)."""
    t = _round_up(max(pl.cdiv(n, target_steps), 8), 8)
    t = min(max(t, min_tile), tile_n)
    return min(t, _round_up(n, 8))


def _vmem_limit_bytes(tile, dim_in, c_pad, x_itemsize, w_itemsize, out_itemsize):
    # Conservative per-step footprint: x + out double-buffered, weights/bias
    # counted double-buffered too (covers the fallback path), 2x headroom.
    per_step = (2 * tile * dim_in * x_itemsize
                + 2 * dim_in * c_pad * w_itemsize
                + 2 * 8 * c_pad * 4
                + 2 * tile * c_pad * out_itemsize)
    return int(min(max(2 * per_step + (4 << 20), 16 << 20), 64 << 20))


def _call_pallas(x, w_fused, b_fused, *, kernel, grid, tile, dim_in, c_pad,
                 out_shape, vmem_limit, single_buffer_weights):
    w_kw = dict(pipeline_mode=pl.Buffered(1)) if single_buffer_weights else {}
    return pl.pallas_call(
        kernel,
        out_shape=out_shape,
        grid_spec=pltpu.PrefetchScalarGridSpec(
            num_scalar_prefetch=0,
            grid=(grid,),
            in_specs=[
                pl.BlockSpec((tile, dim_in), lambda i: (i, 0)),
                # constant block index -> weights/bias stay resident in VMEM
                pl.BlockSpec((dim_in, c_pad), lambda i: (0, 0), **w_kw),
                pl.BlockSpec((1, c_pad), lambda i: (0, 0), **w_kw),
            ],
            out_specs=pl.BlockSpec((tile, c_pad), lambda i: (i, 0)),
        ),
        compiler_params=pltpu.CompilerParams(
            dimension_semantics=("parallel",),
            vmem_limit_bytes=vmem_limit,
        ),
    )(x, w_fused, b_fused)


def refinement_agents_forward(x, w_fused, b_fused, dim_out, r=REFINE_TIMES,
                              seg=None, tile_n=512, out_dtype=jnp.float32):
    """Fused RefinementAgents forward.

    Returns a list of R (N, dim_out) softmax score arrays, matching the
    PyTorch module's return value.
    """
    if x.ndim == 4:
        # detectron RoI-pooled features: 1x1 spatial only (documented contract)
        if x.shape[2] != 1 or x.shape[3] != 1:
            raise ValueError("RefinementAgents expects 1x1 spatial dims on 4-D input")
        x = x.reshape(x.shape[0], x.shape[1])
    n, dim_in = x.shape
    c_pad = w_fused.shape[1]
    if seg is None:
        seg = c_pad // r

    tile = _pick_tile(n, tile_n=tile_n)
    grid = pl.cdiv(n, tile)  # ragged last tile: OOB output rows are dropped by Pallas
    vmem_limit = _vmem_limit_bytes(tile, dim_in, c_pad,
                                   x.dtype.itemsize, w_fused.dtype.itemsize,
                                   jnp.dtype(out_dtype).itemsize)
    # TODO(synk): for very large dim_in (>= ~8K in f32) add a K grid axis
    # ("arbitrary") with an f32 accumulator scratch instead of shrinking tile_n.

    kernel = functools.partial(_refine_fused_kernel, r=r, seg=seg)
    out_shape = jax.ShapeDtypeStruct((n, c_pad), out_dtype)
    kwargs = dict(kernel=kernel, grid=grid, tile=tile, dim_in=dim_in,
                  c_pad=c_pad, out_shape=out_shape, vmem_limit=vmem_limit)
    try:
        out = _call_pallas(x, w_fused, b_fused, single_buffer_weights=True, **kwargs)
    except Exception:
        # pl.Buffered(1) unsupported on this jax/Mosaic -> default double-buffering
        out = _call_pallas(x, w_fused, b_fused, single_buffer_weights=False, **kwargs)

    # Per-head views: 128-lane-aligned slices of the fused output slab.
    return [out[:, i * seg:i * seg + dim_out] for i in range(r)]


if __name__ == "__main__":
    key = jax.random.PRNGKey(0)
    kx, kw = jax.random.split(key)

    # Small RoI-pooled feature batch (1x1 spatial), N deliberately not a
    # multiple of 8 to exercise the ragged-last-tile path.
    N, DIM_IN, DIM_OUT = 10, 32, 16
    x4 = jax.random.normal(kx, (N, DIM_IN, 1, 1), dtype=jnp.float32)
    weights, biases = init_params(kw, DIM_IN, DIM_OUT)

    # plain-JAX reference (PyTorch semantics)
    x2 = x4.reshape(N, DIM_IN)
    refs = [jax.nn.softmax(x2 @ weights[i].T + biases[i], axis=1)
            for i in range(REFINE_TIMES)]

    ok = True

    # --- default production path: bf16 weights (cast once), bf16 x upstream --
    w_bf16, b_bf16, seg = prepare_params(weights, biases,
                                         compute_dtype=jnp.bfloat16)
    scores_bf16 = refinement_agents_forward(x4.astype(jnp.bfloat16),
                                            w_bf16, b_bf16, DIM_OUT,
                                            r=REFINE_TIMES, seg=seg)
    scores_bf16 = [jax.block_until_ready(s) for s in scores_bf16]
    for i in range(REFINE_TIMES):
        ok &= scores_bf16[i].shape == (N, DIM_OUT)
        ok &= bool(jnp.allclose(scores_bf16[i], refs[i], atol=1e-2, rtol=1e-2))

    # --- f32 path: exact numerics check against the reference ---------------
    w_f32, b_f32, seg = prepare_params(weights, biases,
                                       compute_dtype=jnp.float32)
    scores_f32 = refinement_agents_forward(x4, w_f32, b_f32, DIM_OUT,
                                           r=REFINE_TIMES, seg=seg)
    scores_f32 = [jax.block_until_ready(s) for s in scores_f32]
    for i in range(REFINE_TIMES):
        ok &= scores_f32[i].shape == (N, DIM_OUT)
        ok &= bool(jnp.allclose(scores_f32[i], refs[i], atol=1e-5, rtol=1e-5))

    print("KERNEL_OK" if ok else "MISMATCH")
</pallas_src>

<mosaic_0001>
module attributes {stable_mosaic.version = 11 : i64} {
  func.func @_refine_fused_kernel(%arg0: i32, %arg1: memref<16x32xbf16, #tpu.memory_space<vmem>>, %arg2: memref<32x384xbf16, #tpu.memory_space<vmem>>, %arg3: memref<1x384xf32, #tpu.memory_space<vmem>>, %arg4: memref<16x384xf32, #tpu.memory_space<vmem>>) attributes {dimension_semantics = [#tpu.dimension_semantics<parallel>], iteration_bounds = array<i64: 1>, scalar_prefetch = 0 : i64, scratch_operands = 0 : i64, tpu.core_type = #tpu.core_type<tc>, window_params = [{transform_indices = @transform_0, window_bounds = array<i64: 16, 32>}, {pipeline_mode = #tpu.pipeline_mode<synchronous>, transform_indices = @transform_1, window_bounds = array<i64: 32, 384>}, {pipeline_mode = #tpu.pipeline_mode<synchronous>, transform_indices = @transform_2, window_bounds = array<i64: 1, 384>}, {transform_indices = @transform_3, window_bounds = array<i64: 16, 384>}]} {
    %c0 = arith.constant 0 : index
    %c0_0 = arith.constant 0 : index
    %0 = vector.load %arg1[%c0, %c0_0] : memref<16x32xbf16, #tpu.memory_space<vmem>>, vector<16x32xbf16>
    %c0_1 = arith.constant 0 : index
    %c0_2 = arith.constant 0 : index
    %1 = vector.load %arg2[%c0_1, %c0_2] : memref<32x384xbf16, #tpu.memory_space<vmem>>, vector<32x384xbf16>
    %cst = arith.constant dense<0.000000e+00> : vector<16x384xf32>
    %2 = tpu.matmul %0, %1, %cst {dimension_numbers = #tpu.dot_dimension_numbers<[1], [0], [0], [1], [0, 0, 1, 1], [], []>} : vector<16x32xbf16>, vector<32x384xbf16>, vector<16x384xf32> -> vector<16x384xf32>
    %c0_3 = arith.constant 0 : index
    %c0_4 = arith.constant 0 : index
    %3 = vector.load %arg3[%c0_3, %c0_4] : memref<1x384xf32, #tpu.memory_space<vmem>>, vector<1x384xf32>
    %4 = vector.broadcast %3 : vector<1x384xf32> to vector<16x384xf32>
    %5 = arith.addf %2, %4 : vector<16x384xf32>
    %6 = vector.extract_strided_slice %5 {offsets = [0, 0], sizes = [16, 128], strides = [1, 1]} : vector<16x384xf32> to vector<16x128xf32>
    %cst_5 = arith.constant dense<0xFF800000> : vector<16xf32>
    %7 = vector.multi_reduction <maximumf>, %6, %cst_5 [1] : vector<16x128xf32> to vector<16xf32>
    %8 = vector.shape_cast %7 : vector<16xf32> to vector<16x1xf32>
    %9 = vector.broadcast %8 : vector<16x1xf32> to vector<16x128xf32>
    %10 = arith.subf %6, %9 : vector<16x128xf32>
    %11 = math.exp %10 : vector<16x128xf32>
    %cst_6 = arith.constant dense<0.000000e+00> : vector<16xf32>
    %12 = vector.multi_reduction <add>, %11, %cst_6 [1] : vector<16x128xf32> to vector<16xf32>
    %13 = vector.shape_cast %12 : vector<16xf32> to vector<16x1xf32>
    %14 = tpu.reciprocal %13 : vector<16x1xf32> -> vector<16x1xf32>
    %15 = vector.broadcast %14 : vector<16x1xf32> to vector<16x128xf32>
    %16 = arith.mulf %11, %15 : vector<16x128xf32>
    %c0_7 = arith.constant 0 : index
    %c0_8 = arith.constant 0 : index
    %17 = vector.load %arg4[%c0_7, %c0_8] : memref<16x384xf32, #tpu.memory_space<vmem>>, vector<16x128xf32>
    tpu.vector_store %arg4[%c0_7, %c0_8], %16 {strides = array<i32>} : memref<16x384xf32, #tpu.memory_space<vmem>>, vector<16x128xf32>,
    %18 = vector.extract_strided_slice %5 {offsets = [0, 128], sizes = [16, 128], strides = [1, 1]} : vector<16x384xf32> to vector<16x128xf32>
    %cst_9 = arith.constant dense<0xFF800000> : vector<16xf32>
    %19 = vector.multi_reduction <maximumf>, %18, %cst_9 [1] : vector<16x128xf32> to vector<16xf32>
    %20 = vector.shape_cast %19 : vector<16xf32> to vector<16x1xf32>
    %21 = vector.broadcast %20 : vector<16x1xf32> to vector<16x128xf32>
    %22 = arith.subf %18, %21 : vector<16x128xf32>
    %23 = math.exp %22 : vector<16x128xf32>
    %cst_10 = arith.constant dense<0.000000e+00> : vector<16xf32>
    %24 = vector.multi_reduction <add>, %23, %cst_10 [1] : vector<16x128xf32> to vector<16xf32>
    %25 = vector.shape_cast %24 : vector<16xf32> to vector<16x1xf32>
    %26 = tpu.reciprocal %25 : vector<16x1xf32> -> vector<16x1xf32>
    %27 = vector.broadcast %26 : vector<16x1xf32> to vector<16x128xf32>
    %28 = arith.mulf %23, %27 : vector<16x128xf32>
    %c0_11 = arith.constant 0 : index
    %c128 = arith.constant 128 : index
    %29 = vector.load %arg4[%c0_11, %c128] : memref<16x384xf32, #tpu.memory_space<vmem>>, vector<16x128xf32>
    tpu.vector_store %arg4[%c0_11, %c128], %28 {strides = array<i32>} : memref<16x384xf32, #tpu.memory_space<vmem>>, vector<16x128xf32>,
    %30 = vector.extract_strided_slice %5 {offsets = [0, 256], sizes = [16, 128], strides = [1, 1]} : vector<16x384xf32> to vector<16x128xf32>
    %cst_12 = arith.constant dense<0xFF800000> : vector<16xf32>
    %31 = vector.multi_reduction <maximumf>, %30, %cst_12 [1] : vector<16x128xf32> to vector<16xf32>
    %32 = vector.shape_cast %31 : vector<16xf32> to vector<16x1xf32>
    %33 = vector.broadcast %32 : vector<16x1xf32> to vector<16x128xf32>
    %34 = arith.subf %30, %33 : vector<16x128xf32>
    %35 = math.exp %34 : vector<16x128xf32>
    %cst_13 = arith.constant dense<0.000000e+00> : vector<16xf32>
    %36 = vector.multi_reduction <add>, %35, %cst_13 [1] : vector<16x128xf32> to vector<16xf32>
    %37 = vector.shape_cast %36 : vector<16xf32> to vector<16x1xf32>
    %38 = tpu.reciprocal %37 : vector<16x1xf32> -> vector<16x1xf32>
    %39 = vector.broadcast %38 : vector<16x1xf32> to vector<16x128xf32>
    %40 = arith.mulf %35, %39 : vector<16x128xf32>
    %c0_14 = arith.constant 0 : index
    %c256 = arith.constant 256 : index
    %41 = vector.load %arg4[%c0_14, %c256] : memref<16x384xf32, #tpu.memory_space<vmem>>, vector<16x128xf32>
    tpu.vector_store %arg4[%c0_14, %c256], %40 {strides = array<i32>} : memref<16x384xf32, #tpu.memory_space<vmem>>, vector<16x128xf32>,
    return
  }
  func.func @transform_0(%arg0: i32) -> (i32, i32) {
    %c0_i32 = arith.constant 0 : i32
    %c0_i32_0 = arith.constant 0 : i32
    return %arg0, %c0_i32 : i32, i32
  }
  func.func @transform_1(%arg0: i32) -> (i32, i32) {
    %c0_i32 = arith.constant 0 : i32
    %c0_i32_0 = arith.constant 0 : i32
    %c0_i32_1 = arith.constant 0 : i32
    return %c0_i32, %c0_i32_0 : i32, i32
  }
  func.func @transform_2(%arg0: i32) -> (i32, i32) {
    %c0_i32 = arith.constant 0 : i32
    %c0_i32_0 = arith.constant 0 : i32
    %c0_i32_1 = arith.constant 0 : i32
    return %c0_i32, %c0_i32_0 : i32, i32
  }
  func.func @transform_3(%arg0: i32) -> (i32, i32) {
    %c0_i32 = arith.constant 0 : i32
    %c0_i32_0 = arith.constant 0 : i32
    return %arg0, %c0_i32 : i32, i32
  }
}

module attributes {stable_mosaic.version = 11 : i64} {
  func.func @_refine_fused_kernel(%arg0: i32, %arg1: memref<16x32xbf16, #tpu.memory_space<vmem>>, %arg2: memref<32x384xbf16, #tpu.memory_space<vmem>>, %arg3: memref<1x384xf32, #tpu.memory_space<vmem>>, %arg4: memref<16x384xf32, #tpu.memory_space<vmem>>) attributes {dimension_semantics = [#tpu.dimension_semantics<parallel>], iteration_bounds = array<i64: 1>, scalar_prefetch = 0 : i64, scratch_operands = 0 : i64, tpu.core_type = #tpu.core_type<tc>, window_params = [{transform_indices = @transform_0, window_bounds = array<i64: 16, 32>}, {pipeline_mode = #tpu.pipeline_mode<synchronous>, transform_indices = @transform_1, window_bounds = array<i64: 32, 384>}, {pipeline_mode = #tpu.pipeline_mode<synchronous>, transform_indices = @transform_2, window_bounds = array<i64: 1, 384>}, {transform_indices = @transform_3, window_bounds = array<i64: 16, 384>}]} {
    %c0 = arith.constant 0 : index
    %c0_0 = arith.constant 0 : index
    %0 = vector.load %arg1[%c0, %c0_0] : memref<16x32xbf16, #tpu.memory_space<vmem>>, vector<16x32xbf16>
    %c0_1 = arith.constant 0 : index
    %c0_2 = arith.constant 0 : index
    %1 = vector.load %arg2[%c0_1, %c0_2] : memref<32x384xbf16, #tpu.memory_space<vmem>>, vector<32x384xbf16>
    %cst = arith.constant dense<0.000000e+00> : vector<16x384xf32>
    %2 = tpu.matmul %0, %1, %cst {dimension_numbers = #tpu.dot_dimension_numbers<[1], [0], [0], [1], [0, 0, 1, 1], [], []>} : vector<16x32xbf16>, vector<32x384xbf16>, vector<16x384xf32> -> vector<16x384xf32>
    %c0_3 = arith.constant 0 : index
    %c0_4 = arith.constant 0 : index
    %3 = vector.load %arg3[%c0_3, %c0_4] : memref<1x384xf32, #tpu.memory_space<vmem>>, vector<1x384xf32>
    %4 = vector.broadcast %3 : vector<1x384xf32> to vector<16x384xf32>
    %5 = arith.addf %2, %4 : vector<16x384xf32>
    %6 = vector.extract_strided_slice %5 {offsets = [0, 0], sizes = [16, 128], strides = [1, 1]} : vector<16x384xf32> to vector<16x128xf32>
    %cst_5 = arith.constant dense<0xFF800000> : vector<16xf32>
    %7 = vector.multi_reduction <maximumf>, %6, %cst_5 [1] : vector<16x128xf32> to vector<16xf32>
    %8 = vector.shape_cast %7 : vector<16xf32> to vector<16x1xf32>
    %9 = vector.broadcast %8 : vector<16x1xf32> to vector<16x128xf32>
    %10 = arith.subf %6, %9 : vector<16x128xf32>
    %11 = math.exp %10 : vector<16x128xf32>
    %cst_6 = arith.constant dense<0.000000e+00> : vector<16xf32>
    %12 = vector.multi_reduction <add>, %11, %cst_6 [1] : vector<16x128xf32> to vector<16xf32>
    %13 = vector.shape_cast %12 : vector<16xf32> to vector<16x1xf32>
    %14 = tpu.reciprocal %13 : vector<16x1xf32> -> vector<16x1xf32>
    %15 = vector.broadcast %14 : vector<16x1xf32> to vector<16x128xf32>
    %16 = arith.mulf %11, %15 : vector<16x128xf32>
    %c0_7 = arith.constant 0 : index
    %c0_8 = arith.constant 0 : index
    %17 = vector.load %arg4[%c0_7, %c0_8] : memref<16x384xf32, #tpu.memory_space<vmem>>, vector<16x128xf32>
    tpu.vector_store %arg4[%c0_7, %c0_8], %16 {strides = array<i32>} : memref<16x384xf32, #tpu.memory_space<vmem>>, vector<16x128xf32>,
    %18 = vector.extract_strided_slice %5 {offsets = [0, 128], sizes = [16, 128], strides = [1, 1]} : vector<16x384xf32> to vector<16x128xf32>
    %cst_9 = arith.constant dense<0xFF800000> : vector<16xf32>
    %19 = vector.multi_reduction <maximumf>, %18, %cst_9 [1] : vector<16x128xf32> to vector<16xf32>
    %20 = vector.shape_cast %19 : vector<16xf32> to vector<16x1xf32>
    %21 = vector.broadcast %20 : vector<16x1xf32> to vector<16x128xf32>
    %22 = arith.subf %18, %21 : vector<16x128xf32>
    %23 = math.exp %22 : vector<16x128xf32>
    %cst_10 = arith.constant dense<0.000000e+00> : vector<16xf32>
    %24 = vector.multi_reduction <add>, %23, %cst_10 [1] : vector<16x128xf32> to vector<16xf32>
    %25 = vector.shape_cast %24 : vector<16xf32> to vector<16x1xf32>
    %26 = tpu.reciprocal %25 : vector<16x1xf32> -> vector<16x1xf32>
    %27 = vector.broadcast %26 : vector<16x1xf32> to vector<16x128xf32>
    %28 = arith.mulf %23, %27 : vector<16x128xf32>
    %c0_11 = arith.constant 0 : index
    %c128 = arith.constant 128 : index
    %29 = vector.load %arg4[%c0_11, %c128] : memref<16x384xf32, #tpu.memory_space<vmem>>, vector<16x128xf32>
    tpu.vector_store %arg4[%c0_11, %c128], %28 {strides = array<i32>} : memref<16x384xf32, #tpu.memory_space<vmem>>, vector<16x128xf32>,
    %30 = vector.extract_strided_slice %5 {offsets = [0, 256], sizes = [16, 128], strides = [1, 1]} : vector<16x384xf32> to vector<16x128xf32>
    %cst_12 = arith.constant dense<0xFF800000> : vector<16xf32>
    %31 = vector.multi_reduction <maximumf>, %30, %cst_12 [1] : vector<16x128xf32> to vector<16xf32>
    %32 = vector.shape_cast %31 : vector<16xf32> to vector<16x1xf32>
    %33 = vector.broadcast %32 : vector<16x1xf32> to vector<16x128xf32>
    %34 = arith.subf %30, %33 : vector<16x128xf32>
    %35 = math.exp %34 : vector<16x128xf32>
    %cst_13 = arith.constant dense<0.000000e+00> : vector<16xf32>
    %36 = vector.multi_reduction <add>, %35, %cst_13 [1] : vector<16x128xf32> to vector<16xf32>
    %37 = vector.shape_cast %36 : vector<16xf32> to vector<16x1xf32>
    %38 = tpu.reciprocal %37 : vector<16x1xf32> -> vector<16x1xf32>
    %39 = vector.broadcast %38 : vector<16x1xf32> to vector<16x128xf32>
    %40 = arith.mulf %35, %39 : vector<16x128xf32>
    %c0_14 = arith.constant 0 : index
    %c256 = arith.constant 256 : index
    %41 = vector.load %arg4[%c0_14, %c256] : memref<16x384xf32, #tpu.memory_space<vmem>>, vector<16x128xf32>
    tpu.vector_store %arg4[%c0_14, %c256], %40 {strides = array<i32>} : memref<16x384xf32, #tpu.memory_space<vmem>>, vector<16x128xf32>,
    return
  }
  func.func @transform_0(%arg0: i32) -> (i32, i32) {
    %c0_i32 = arith.constant 0 : i32
    %c0_i32_0 = arith.constant 0 : i32
    return %arg0, %c0_i32 : i32, i32
  }
  func.func @transform_1(%arg0: i32) -> (i32, i32) {
    %c0_i32 = arith.constant 0 : i32
    %c0_i32_0 = arith.constant 0 : i32
    %c0_i32_1 = arith.constant 0 : i32
    return %c0_i32, %c0_i32_0 : i32, i32
  }
  func.func @transform_2(%arg0: i32) -> (i32, i32) {
    %c0_i32 = arith.constant 0 : i32
    %c0_i32_0 = arith.constant 0 : i32
    %c0_i32_1 = arith.constant 0 : i32
    return %c0_i32, %c0_i32_0 : i32, i32
  }
  func.func @transform_3(%arg0: i32) -> (i32, i32) {
    %c0_i32 = arith.constant 0 : i32
    %c0_i32_0 = arith.constant 0 : i32
    return %arg0, %c0_i32 : i32, i32
  }
}

</mosaic_0001>

<llo_original>
// kernel: tpu_custom_call.1
$region0: #{tpu_custom_call.1}
  #allocation0 [shape = 'u32[]', space=smem, size = 0x4, offset = 0x4, fixed_abs, tag = 'smem constant byte address 0x4 - core index']
  #allocation1 [shape = 'u32[72,128]{1,0:T(1,128)}', space=vmem, size = 0x9000, scoped, tag = 'internal scratch']
  %s0 = inlined_call_operand.hbm [shape: bf16[10,32], index: 0, kind: input, shape index: {}]
  %s1 = inlined_call_operand.hbm [shape: bf16[32,384], index: 1, kind: input, shape index: {}]
  %s2 = inlined_call_operand.hbm [shape: f32[1,384], index: 2, kind: input, shape index: {}]
  %s3 = inlined_call_operand.hbm [shape: f32[10,384], index: 3, kind: output, shape index: {}]
  %s4 = sld [smem:[#allocation0]]
  $region34: #{tpu_custom_call.1} parent=0
    _
  %s6 = ssub.s32 1, %s4
  %s7 = scalar_select 0, %s6, %s4
  $region1: #{tpu_custom_call.1} parent=0
    #allocation2 [shape = 'u8[4096]{0}', space=vmem, size = 0x1000, scoped, tag = 'input window, operand 0, single buffered']
    #allocation3 [shape = 's32[1]{0}', space=sflag, size = 0x4, scoped, tag = 'scoped memory for tpu_custom_call.1']
    #allocation4 [shape = 's32[1]{0}', space=sflag, size = 0x4, scoped, tag = 'scoped memory for tpu_custom_call.1']
    #allocation5 [shape = 'u8[24576]{0}', space=vmem, size = 0x6000, scoped, tag = 'input window, operand 1, single buffered']
    #allocation6 [shape = 's32[1]{0}', space=sflag, size = 0x4, scoped, tag = 'scoped memory for tpu_custom_call.1']
    #allocation7 [shape = 'u8[1536]{0}', space=vmem, size = 0x800, scoped, tag = 'input window, operand 2, single buffered']
    #allocation8 [shape = 'u8[24576]{0}', space=vmem, size = 0x6000, scoped, tag = 'output window, operand 0, single buffered']
    %8 = vsyncpa [#allocation3], 0
    %9 = vsyncpa [#allocation6], 0
    %10 = vsyncpa [#allocation4], 0
    // Predicated region
    $region2: #{tpu_custom_call.1} parent=1 // pred_check
      _
    $region3: #{tpu_custom_call.1} parent=1 // pred_check_branch
      %12 = sbr.rel (0) target = $region5
    $region4: #{tpu_custom_call.1} parent=1 // pred_region
      %14 = vsyncadd [#allocation3], 0
      %s15 = sshll.u32 %s0, 4
      %s16 = int_to_ptr.hbm [resolvable:$true] %s15
      %s17 = sshll.u32 [#allocation2], 4
      %s18 = int_to_ptr.vmem [resolvable:$true] %s17
      %23 = dma.hbm_to_vmem [thread:$0]  %s16, 128, %s18, [#allocation3], 64, 64, 4
    $region5: #{tpu_custom_call.1} parent=1 // pred_fallthru
      _
    // Predicated region
    $region6: #{tpu_custom_call.1} parent=1 // pred_check
      _
    $region7: #{tpu_custom_call.1} parent=1 // pred_check_branch
      %25 = sbr.rel (0) target = $region9
    $region8: #{tpu_custom_call.1} parent=1 // pred_region
      %27 = vsyncadd [#allocation6], 0
      %s28 = sshll.u32 %s1, 4
      %s29 = int_to_ptr.hbm [resolvable:$true] %s28
      %s30 = sshll.u32 [#allocation5], 4
      %s31 = int_to_ptr.vmem [resolvable:$true] %s30
      %36 = dma.hbm_to_vmem [thread:$0]  %s29, 768, %s31, [#allocation6], 192, 192, 12
    $region9: #{tpu_custom_call.1} parent=1 // pred_fallthru
      _
    // Predicated region
    $region10: #{tpu_custom_call.1} parent=1 // pred_check
      _
    $region11: #{tpu_custom_call.1} parent=1 // pred_check_branch
      %38 = sbr.rel (0) target = $region13
    $region12: #{tpu_custom_call.1} parent=1 // pred_region
      %40 = vsyncadd [#allocation6], 0
      %s42 = sshll.u32 %s2, 4
      %s43 = int_to_ptr.hbm [resolvable:$true] %s42
      %s44 = sshll.u32 [#allocation7], 4
      %s45 = int_to_ptr.vmem [resolvable:$true] %s44
      %47 = dma.hbm_to_vmem [thread:$0]  %s43, 48, %s45, [#allocation6]
    $region13: #{tpu_custom_call.1} parent=1 // pred_fallthru
      _
    // Predicated region
    $region14: #{tpu_custom_call.1} parent=1 // pred_check
      _
    $region15: #{tpu_custom_call.1} parent=1 // pred_check_branch
      %49 = sbr.rel (0) target = $region17
    $region16: #{tpu_custom_call.1} parent=1 // pred_region
      %51 = dma.done [#allocation3], 128
    $region17: #{tpu_custom_call.1} parent=1 // pred_fallthru
      _
    // Predicated region
    $region18: #{tpu_custom_call.1} parent=1 // pred_check
      _
    $region19: #{tpu_custom_call.1} parent=1 // pred_check_branch
      %53 = sbr.rel (0) target = $region21
    $region20: #{tpu_custom_call.1} parent=1 // pred_region
      %55 = dma.done [#allocation6], 768
    $region21: #{tpu_custom_call.1} parent=1 // pred_fallthru
      _
    // Predicated region
    $region22: #{tpu_custom_call.1} parent=1 // pred_check
      _
    $region23: #{tpu_custom_call.1} parent=1 // pred_check_branch
      %57 = sbr.rel (0) target = $region25
    $region24: #{tpu_custom_call.1} parent=1 // pred_region
      %59 = dma.done [#allocation6], 48
    $region25: #{tpu_custom_call.1} parent=1 // pred_fallthru
      _
    %v61 = vld [vmem:[#allocation2] sm:$0xf]
    %v62 = vld [vmem:[#allocation2 + $0x4] sm:$0xf]
    %v63 = vld [vmem:[#allocation5] sm:$0xff]
    %v64 = vld [vmem:[#allocation5 + $0x8] sm:$0xf]
    %v65 = vld [vmem:[#allocation5 + $0xc] sm:$0xff]
    %v66 = vld [vmem:[#allocation5 + $0x14] sm:$0xf]
    %v67 = vld [vmem:[#allocation5 + $0x18] sm:$0xff]
    %v68 = vld [vmem:[#allocation5 + $0x20] sm:$0xf]
    %v69 = vld [vmem:[#allocation5 + $0x24] sm:$0xff]
    %v70 = vld [vmem:[#allocation5 + $0x2c] sm:$0xf]
    %v71 = vld [vmem:[#allocation7] sm:$0x7]
    %v73 = vperm.slane %v71, 0
    %v74 = vperm.slane %v71, 1
    %v75 = vperm.slane %v71, 2
    %v81 = vunpack.c.l.b16 %v61
    %v82 = vunpack.c.l.b16 %v62
    %v83 = vpack.c.b16 %v82, %v81
    %v92 = vunpack.c.l.b16 %v63
    %v93 = vunpack.c.h.b16 %v63
    %v94 = vunpack.c.l.b16 %v64
    %v95 = vunpack.c.l.b16 %v65
    %v96 = vunpack.c.h.b16 %v65
    %v97 = vunpack.c.l.b16 %v66
    %v98 = vunpack.c.l.b16 %v67
    %v99 = vunpack.c.h.b16 %v67
    %v100 = vunpack.c.l.b16 %v68
    %v101 = vunpack.c.l.b16 %v69
    %v102 = vunpack.c.h.b16 %v69
    %v103 = vunpack.c.l.b16 %v70
    %v104 = vpack.c.b16 %v95, %v92
    %v105 = vpack.c.b16 %v96, %v93
    %v106 = vpack.c.b16 %v97, %v94
    %v107 = vpack.c.b16 %v101, %v98
    %v108 = vpack.c.b16 %v102, %v99
    %v109 = vpack.c.b16 %v103, %v100
    %vm116 = vcmask 261120
    %v118 = vsel %vm116, %v83, 0
    %120 = vmatpush.bf16.msra.mxu0 0
    %121 = vmatpush.bf16.msra.mxu0 0
    %122 = vmatpush.bf16.msra.mxu0 0
    %123 = vmatpush.bf16.msra.mxu0 0
    %124 = vmatpush.bf16.msra.mxu0 0
    %125 = vmatpush.bf16.msra.mxu0 0
    %126 = vmatpush.bf16.msra.mxu0 %v107
    %127 = vmatpush.bf16.msra.mxu0 %v104
    %128 = vmatmul.bf16.gmra.mxu0 %v118
    %v129 = vpop.f32.mrf.mxu0
    %v130 = vadd.f32 %v73, %v129
    %v131 = vpop.f32.mrf.mxu0
    %v132 = vadd.f32 %v73, %v131
    %133 = vdwg.mxu0
    %134 = vmatpush.bf16.msra.mxu0 0
    %135 = vmatpush.bf16.msra.mxu0 0
    %136 = vmatpush.bf16.msra.mxu0 0
    %137 = vmatpush.bf16.msra.mxu0 0
    %138 = vmatpush.bf16.msra.mxu0 0
    %139 = vmatpush.bf16.msra.mxu0 0
    %140 = vmatpush.bf16.msra.mxu0 %v108
    %141 = vmatpush.bf16.msra.mxu0 %v105
    %142 = vmatmul.bf16.gmra.mxu0 %v118
    %v143 = vpop.f32.mrf.mxu0
    %v144 = vadd.f32 %v74, %v143
    %v145 = vpop.f32.mrf.mxu0
    %v146 = vadd.f32 %v74, %v145
    %147 = vdwg.mxu0
    %148 = vmatpush.bf16.msra.mxu0 0
    %149 = vmatpush.bf16.msra.mxu0 0
    %150 = vmatpush.bf16.msra.mxu0 0
    %151 = vmatpush.bf16.msra.mxu0 0
    %152 = vmatpush.bf16.msra.mxu0 0
    %153 = vmatpush.bf16.msra.mxu0 0
    %154 = vmatpush.bf16.msra.mxu0 %v109
    %155 = vmatpush.bf16.msra.mxu0 %v106
    %156 = vmatmul.bf16.gmra.mxu0 %v118
    %v157 = vpop.f32.mrf.mxu0
    %v158 = vadd.f32 %v75, %v157
    %v159 = vpop.f32.mrf.mxu0
    %v160 = vadd.f32 %v75, %v159
    %161 = vdwg.mxu0
    %162 = vmax.xlane.f32.xlu0 %v130
    %v163 = vpop.xlane.xlu0 %162
    %164 = vmax.xlane.f32.xlu0 %v132
    %v165 = vpop.xlane.xlu0 %164
    %v166 = vsub.f32 %v130, %v163
    %v167 = vsub.f32 %v132, %v165
    %v168 = vmul.f32 %v166, 1.442695
    %v169 = vpow.pop %v168
    %v170 = vmul.f32 %v167, 1.442695
    %v171 = vpow.pop %v170
    %172 = vadd.xlane.f32.xlu0 %v169
    %v173 = vpop.xlane.xlu0 %172
    %174 = vadd.xlane.f32.xlu0 %v171
    %v175 = vpop.xlane.xlu0 %174
    %v176 = vrcp.pop %v173
    %v177 = vmul.f32 %v173, %v176
    %v178 = vsub.f32 1.0, %v177
    %v179 = vmul.f32 %v176, %v178
    %v180 = vadd.f32 %v176, %v179
    %vm181 = vweird.f32 %v173
    %vm182 = vweird.f32 %v176
    %vm183 = vmor %vm181, %vm182
    %v184 = vsel %vm183, %v176, %v180
    %v185 = vand.u32 2147483647, %v173
    %vm186 = vcmp.eq.f32.partialorder %v185, 8.507059e+37
    %v187 = vand.u32 %v173, 2147483648
    %v188 = vor.u32 1.1754944e-38, %v187
    %v189 = vsel %vm186, %v188, %v184
    %v190 = vrcp.pop %v175
    %v191 = vmul.f32 %v175, %v190
    %v192 = vsub.f32 1.0, %v191
    %v193 = vmul.f32 %v190, %v192
    %v194 = vadd.f32 %v190, %v193
    %vm195 = vweird.f32 %v175
    %vm196 = vweird.f32 %v190
    %vm197 = vmor %vm195, %vm196
    %v198 = vsel %vm197, %v190, %v194
    %v199 = vand.u32 2147483647, %v175
    %vm200 = vcmp.eq.f32.partialorder %v199, 8.507059e+37
    %v201 = vand.u32 %v175, 2147483648
    %v202 = vor.u32 1.1754944e-38, %v201
    %v203 = vsel %vm200, %v202, %v198
    %v204 = vmul.f32 %v169, %v189
    %v205 = vmul.f32 %v171, %v203
    %206 = vst [vmem:[#allocation8] sm:$0xff] %v204
    %207 = vst [vmem:[#allocation8 + $0x18] sm:$0xff] %v205
    %208 = vmax.xlane.f32.xlu0 %v144
    %v209 = vpop.xlane.xlu0 %208
    %210 = vmax.xlane.f32.xlu0 %v146
    %v211 = vpop.xlane.xlu0 %210
    %v212 = vsub.f32 %v144, %v209
    %v213 = vsub.f32 %v146, %v211
    %v214 = vmul.f32 %v212, 1.442695
    %v215 = vpow.pop %v214
    %v216 = vmul.f32 %v213, 1.442695
    %v217 = vpow.pop %v216
    %218 = vadd.xlane.f32.xlu0 %v215
    %v219 = vpop.xlane.xlu0 %218
    %220 = vadd.xlane.f32.xlu0 %v217
    %v221 = vpop.xlane.xlu0 %220
    %v222 = vrcp.pop %v219
    %v223 = vmul.f32 %v219, %v222
    %v224 = vsub.f32 1.0, %v223
    %v225 = vmul.f32 %v222, %v224
    %v226 = vadd.f32 %v222, %v225
    %vm227 = vweird.f32 %v219
    %vm228 = vweird.f32 %v222
    %vm229 = vmor %vm227, %vm228
    %v230 = vsel %vm229, %v222, %v226
    %v231 = vand.u32 2147483647, %v219
    %vm232 = vcmp.eq.f32.partialorder %v231, 8.507059e+37
    %v233 = vand.u32 %v219, 2147483648
    %v234 = vor.u32 1.1754944e-38, %v233
    %v235 = vsel %vm232, %v234, %v230
    %v236 = vrcp.pop %v221
    %v237 = vmul.f32 %v221, %v236
    %v238 = vsub.f32 1.0, %v237
    %v239 = vmul.f32 %v236, %v238
    %v240 = vadd.f32 %v236, %v239
    %vm241 = vweird.f32 %v221
    %vm242 = vweird.f32 %v236
    %vm243 = vmor %vm241, %vm242
    %v244 = vsel %vm243, %v236, %v240
    %v245 = vand.u32 2147483647, %v221
    %vm246 = vcmp.eq.f32.partialorder %v245, 8.507059e+37
    %v247 = vand.u32 %v221, 2147483648
    %v248 = vor.u32 1.1754944e-38, %v247
    %v249 = vsel %vm246, %v248, %v244
    %v250 = vmul.f32 %v215, %v235
    %v251 = vmul.f32 %v217, %v249
    %252 = vst [vmem:[#allocation8 + $0x8] sm:$0xff] %v250
    %253 = vst [vmem:[#allocation8 + $0x20] sm:$0xff] %v251
    %254 = vmax.xlane.f32.xlu0 %v158
    %v255 = vpop.xlane.xlu0 %254
    %256 = vmax.xlane.f32.xlu0 %v160
    %v257 = vpop.xlane.xlu0 %256
    %v258 = vsub.f32 %v158, %v255
    %v259 = vsub.f32 %v160, %v257
    %v260 = vmul.f32 %v258, 1.442695
    %v261 = vpow.pop %v260
    %v262 = vmul.f32 %v259, 1.442695
    %v263 = vpow.pop %v262
    %264 = vadd.xlane.f32.xlu0 %v261
    %v265 = vpop.xlane.xlu0 %264
    %266 = vadd.xlane.f32.xlu0 %v263
    %v267 = vpop.xlane.xlu0 %266
    %v268 = vrcp.pop %v265
    %v269 = vmul.f32 %v265, %v268
    %v270 = vsub.f32 1.0, %v269
    %v271 = vmul.f32 %v268, %v270
    %v272 = vadd.f32 %v268, %v271
    %vm273 = vweird.f32 %v265
    %vm274 = vweird.f32 %v268
    %vm275 = vmor %vm273, %vm274
    %v276 = vsel %vm275, %v268, %v272
    %v277 = vand.u32 2147483647, %v265
    %vm278 = vcmp.eq.f32.partialorder %v277, 8.507059e+37
    %v279 = vand.u32 %v265, 2147483648
    %v280 = vor.u32 1.1754944e-38, %v279
    %v281 = vsel %vm278, %v280, %v276
    %v282 = vrcp.pop %v267
    %v283 = vmul.f32 %v267, %v282
    %v284 = vsub.f32 1.0, %v283
    %v285 = vmul.f32 %v282, %v284
    %v286 = vadd.f32 %v282, %v285
    %vm287 = vweird.f32 %v267
    %vm288 = vweird.f32 %v282
    %vm289 = vmor %vm287, %vm288
    %v290 = vsel %vm289, %v282, %v286
    %v291 = vand.u32 2147483647, %v267
    %vm292 = vcmp.eq.f32.partialorder %v291, 8.507059e+37
    %v293 = vand.u32 %v267, 2147483648
    %v294 = vor.u32 1.1754944e-38, %v293
    %v295 = vsel %vm292, %v294, %v290
    %v296 = vmul.f32 %v261, %v281
    %v297 = vmul.f32 %v263, %v295
    %298 = vst [vmem:[#allocation8 + $0x10] sm:$0xff] %v296
    %299 = vst [vmem:[#allocation8 + $0x28] sm:$0xff] %v297
    // Predicated region
    $region26: #{tpu_custom_call.1} parent=1 // pred_check
      _
    $region27: #{tpu_custom_call.1} parent=1 // pred_check_branch
      %301 = sbr.rel (0) target = $region29
    $region28: #{tpu_custom_call.1} parent=1 // pred_region
      %303 = vsyncadd [#allocation4], 0
      %s304 = sshll.u32 [#allocation8], 4
      %s305 = int_to_ptr.vmem [resolvable:$true] %s304
      %s306 = sshll.u32 %s3, 4
      %s307 = int_to_ptr.hbm [resolvable:$true] %s306
      %312 = dma.vmem_to_hbm [thread:$0]  %s305, 768, %s307, [#allocation4], 384, 384, 24
    $region29: #{tpu_custom_call.1} parent=1 // pred_fallthru
      _
    // Predicated region
    $region30: #{tpu_custom_call.1} parent=1 // pred_check
      _
    $region31: #{tpu_custom_call.1} parent=1 // pred_check_branch
      %314 = sbr.rel (0) target = $region33
    $region32: #{tpu_custom_call.1} parent=1 // pred_region
      %316 = dma.done [#allocation4], 768
    $region33: #{tpu_custom_call.1} parent=1 // pred_fallthru
      _
    %317 = vsyncpa [#allocation3], 1
    %318 = vsyncpa [#allocation6], 1
    %319 = vsyncpa [#allocation4], 1

// kernel: tpu_custom_call.1
$region0: #{tpu_custom_call.1}
  #allocation0 [shape = 'u32[]', space=smem, size = 0x4, offset = 0x4, fixed_abs, tag = 'smem constant byte address 0x4 - core index']
  #allocation1 [shape = 'u32[72,128]{1,0:T(1,128)}', space=vmem, size = 0x9000, scoped, tag = 'internal scratch']
  %s0 = inlined_call_operand.hbm [shape: bf16[10,32], index: 0, kind: input, shape index: {}]
  %s1 = inlined_call_operand.hbm [shape: bf16[32,384], index: 1, kind: input, shape index: {}]
  %s2 = inlined_call_operand.hbm [shape: f32[1,384], index: 2, kind: input, shape index: {}]
  %s3 = inlined_call_operand.hbm [shape: f32[10,384], index: 3, kind: output, shape index: {}]
  %s4 = sld [smem:[#allocation0]]
  $region34: #{tpu_custom_call.1} parent=0
    _
  %s6 = ssub.s32 1, %s4
  %s7 = scalar_select 0, %s6, %s4
  $region1: #{tpu_custom_call.1} parent=0
    #allocation2 [shape = 'u8[4096]{0}', space=vmem, size = 0x1000, scoped, tag = 'input window, operand 0, single buffered']
    #allocation3 [shape = 's32[1]{0}', space=sflag, size = 0x4, scoped, tag = 'scoped memory for tpu_custom_call.1']
    #allocation4 [shape = 's32[1]{0}', space=sflag, size = 0x4, scoped, tag = 'scoped memory for tpu_custom_call.1']
    #allocation5 [shape = 'u8[24576]{0}', space=vmem, size = 0x6000, scoped, tag = 'input window, operand 1, single buffered']
    #allocation6 [shape = 's32[1]{0}', space=sflag, size = 0x4, scoped, tag = 'scoped memory for tpu_custom_call.1']
    #allocation7 [shape = 'u8[1536]{0}', space=vmem, size = 0x800, scoped, tag = 'input window, operand 2, single buffered']
    #allocation8 [shape = 'u8[24576]{0}', space=vmem, size = 0x6000, scoped, tag = 'output window, operand 0, single buffered']
    %8 = vsyncpa [#allocation3], 0
    %9 = vsyncpa [#allocation6], 0
    %10 = vsyncpa [#allocation4], 0
    // Predicated region
    $region2: #{tpu_custom_call.1} parent=1 // pred_check
      _
    $region3: #{tpu_custom_call.1} parent=1 // pred_check_branch
      %12 = sbr.rel (0) target = $region5
    $region4: #{tpu_custom_call.1} parent=1 // pred_region
      %14 = vsyncadd [#allocation3], 0
      %s15 = sshll.u32 %s0, 4
      %s16 = int_to_ptr.hbm [resolvable:$true] %s15
      %s17 = sshll.u32 [#allocation2], 4
      %s18 = int_to_ptr.vmem [resolvable:$true] %s17
      %23 = dma.hbm_to_vmem [thread:$0]  %s16, 128, %s18, [#allocation3], 64, 64, 4
    $region5: #{tpu_custom_call.1} parent=1 // pred_fallthru
      _
    // Predicated region
    $region6: #{tpu_custom_call.1} parent=1 // pred_check
      _
    $region7: #{tpu_custom_call.1} parent=1 // pred_check_branch
      %25 = sbr.rel (0) target = $region9
    $region8: #{tpu_custom_call.1} parent=1 // pred_region
      %27 = vsyncadd [#allocation6], 0
      %s28 = sshll.u32 %s1, 4
      %s29 = int_to_ptr.hbm [resolvable:$true] %s28
      %s30 = sshll.u32 [#allocation5], 4
      %s31 = int_to_ptr.vmem [resolvable:$true] %s30
      %36 = dma.hbm_to_vmem [thread:$0]  %s29, 768, %s31, [#allocation6], 192, 192, 12
    $region9: #{tpu_custom_call.1} parent=1 // pred_fallthru
      _
    // Predicated region
    $region10: #{tpu_custom_call.1} parent=1 // pred_check
      _
    $region11: #{tpu_custom_call.1} parent=1 // pred_check_branch
      %38 = sbr.rel (0) target = $region13
    $region12: #{tpu_custom_call.1} parent=1 // pred_region
      %40 = vsyncadd [#allocation6], 0
      %s42 = sshll.u32 %s2, 4
      %s43 = int_to_ptr.hbm [resolvable:$true] %s42
      %s44 = sshll.u32 [#allocation7], 4
      %s45 = int_to_ptr.vmem [resolvable:$true] %s44
      %47 = dma.hbm_to_vmem [thread:$0]  %s43, 48, %s45, [#allocation6]
    $region13: #{tpu_custom_call.1} parent=1 // pred_fallthru
      _
    // Predicated region
    $region14: #{tpu_custom_call.1} parent=1 // pred_check
      _
    $region15: #{tpu_custom_call.1} parent=1 // pred_check_branch
      %49 = sbr.rel (0) target = $region17
    $region16: #{tpu_custom_call.1} parent=1 // pred_region
      %51 = dma.done [#allocation3], 128
    $region17: #{tpu_custom_call.1} parent=1 // pred_fallthru
      _
    // Predicated region
    $region18: #{tpu_custom_call.1} parent=1 // pred_check
      _
    $region19: #{tpu_custom_call.1} parent=1 // pred_check_branch
      %53 = sbr.rel (0) target = $region21
    $region20: #{tpu_custom_call.1} parent=1 // pred_region
      %55 = dma.done [#allocation6], 768
    $region21: #{tpu_custom_call.1} parent=1 // pred_fallthru
      _
    // Predicated region
    $region22: #{tpu_custom_call.1} parent=1 // pred_check
      _
    $region23: #{tpu_custom_call.1} parent=1 // pred_check_branch
      %57 = sbr.rel (0) target = $region25
    $region24: #{tpu_custom_call.1} parent=1 // pred_region
      %59 = dma.done [#allocation6], 48
    $region25: #{tpu_custom_call.1} parent=1 // pred_fallthru
      _
    %v61 = vld [vmem:[#allocation2] sm:$0xf]
    %v62 = vld [vmem:[#allocation2 + $0x4] sm:$0xf]
    %v63 = vld [vmem:[#allocation5] sm:$0xff]
    %v64 = vld [vmem:[#allocation5 + $0x8] sm:$0xf]
    %v65 = vld [vmem:[#allocation5 + $0xc] sm:$0xff]
    %v66 = vld [vmem:[#allocation5 + $0x14] sm:$0xf]
    %v67 = vld [vmem:[#allocation5 + $0x18] sm:$0xff]
    %v68 = vld [vmem:[#allocation5 + $0x20] sm:$0xf]
    %v69 = vld [vmem:[#allocation5 + $0x24] sm:$0xff]
    %v70 = vld [vmem:[#allocation5 + $0x2c] sm:$0xf]
    %v71 = vld [vmem:[#allocation7] sm:$0x7]
    %v73 = vperm.slane %v71, 0
    %v74 = vperm.slane %v71, 1
    %v75 = vperm.slane %v71, 2
    %v81 = vunpack.c.l.b16 %v61
    %v82 = vunpack.c.l.b16 %v62
    %v83 = vpack.c.b16 %v82, %v81
    %v92 = vunpack.c.l.b16 %v63
    %v93 = vunpack.c.h.b16 %v63
    %v94 = vunpack.c.l.b16 %v64
    %v95 = vunpack.c.l.b16 %v65
    %v96 = vunpack.c.h.b16 %v65
    %v97 = vunpack.c.l.b16 %v66
    %v98 = vunpack.c.l.b16 %v67
    %v99 = vunpack.c.h.b16 %v67
    %v100 = vunpack.c.l.b16 %v68
    %v101 = vunpack.c.l.b16 %v69
    %v102 = vunpack.c.h.b16 %v69
    %v103 = vunpack.c.l.b16 %v70
    %v104 = vpack.c.b16 %v95, %v92
    %v105 = vpack.c.b16 %v96, %v93
    %v106 = vpack.c.b16 %v97, %v94
    %v107 = vpack.c.b16 %v101, %v98
    %v108 = vpack.c.b16 %v102, %v99
    %v109 = vpack.c.b16 %v103, %v100
    %vm116 = vcmask 261120
    %v118 = vsel %vm116, %v83, 0
    %120 = vmatpush.bf16.msra.mxu0 0
    %121 = vmatpush.bf16.msra.mxu0 0
    %122 = vmatpush.bf16.msra.mxu0 0
    %123 = vmatpush.bf16.msra.mxu0 0
    %124 = vmatpush.bf16.msra.mxu0 0
    %125 = vmatpush.bf16.msra.mxu0 0
    %126 = vmatpush.bf16.msra.mxu0 %v107
    %127 = vmatpush.bf16.msra.mxu0 %v104
    %128 = vmatmul.bf16.gmra.mxu0 %v118
    %v129 = vpop.f32.mrf.mxu0
    %v130 = vadd.f32 %v73, %v129
    %v131 = vpop.f32.mrf.mxu0
    %v132 = vadd.f32 %v73, %v131
    %133 = vdwg.mxu0
    %134 = vmatpush.bf16.msra.mxu0 0
    %135 = vmatpush.bf16.msra.mxu0 0
    %136 = vmatpush.bf16.msra.mxu0 0
    %137 = vmatpush.bf16.msra.mxu0 0
    %138 = vmatpush.bf16.msra.mxu0 0
    %139 = vmatpush.bf16.msra.mxu0 0
    %140 = vmatpush.bf16.msra.mxu0 %v108
    %141 = vmatpush.bf16.msra.mxu0 %v105
    %142 = vmatmul.bf16.gmra.mxu0 %v118
    %v143 = vpop.f32.mrf.mxu0
    %v144 = vadd.f32 %v74, %v143
    %v145 = vpop.f32.mrf.mxu0
    %v146 = vadd.f32 %v74, %v145
    %147 = vdwg.mxu0
    %148 = vmatpush.bf16.msra.mxu0 0
    %149 = vmatpush.bf16.msra.mxu0 0
    %150 = vmatpush.bf16.msra.mxu0 0
    %151 = vmatpush.bf16.msra.mxu0 0
    %152 = vmatpush.bf16.msra.mxu0 0
    %153 = vmatpush.bf16.msra.mxu0 0
    %154 = vmatpush.bf16.msra.mxu0 %v109
    %155 = vmatpush.bf16.msra.mxu0 %v106
    %156 = vmatmul.bf16.gmra.mxu0 %v118
    %v157 = vpop.f32.mrf.mxu0
    %v158 = vadd.f32 %v75, %v157
    %v159 = vpop.f32.mrf.mxu0
    %v160 = vadd.f32 %v75, %v159
    %161 = vdwg.mxu0
    %162 = vmax.xlane.f32.xlu0 %v130
    %v163 = vpop.xlane.xlu0 %162
    %164 = vmax.xlane.f32.xlu0 %v132
    %v165 = vpop.xlane.xlu0 %164
    %v166 = vsub.f32 %v130, %v163
    %v167 = vsub.f32 %v132, %v165
    %v168 = vmul.f32 %v166, 1.442695
    %v169 = vpow.pop %v168
    %v170 = vmul.f32 %v167, 1.442695
    %v171 = vpow.pop %v170
    %172 = vadd.xlane.f32.xlu0 %v169
    %v173 = vpop.xlane.xlu0 %172
    %174 = vadd.xlane.f32.xlu0 %v171
    %v175 = vpop.xlane.xlu0 %174
    %v176 = vrcp.pop %v173
    %v177 = vmul.f32 %v173, %v176
    %v178 = vsub.f32 1.0, %v177
    %v179 = vmul.f32 %v176, %v178
    %v180 = vadd.f32 %v176, %v179
    %vm181 = vweird.f32 %v173
    %vm182 = vweird.f32 %v176
    %vm183 = vmor %vm181, %vm182
    %v184 = vsel %vm183, %v176, %v180
    %v185 = vand.u32 2147483647, %v173
    %vm186 = vcmp.eq.f32.partialorder %v185, 8.507059e+37
    %v187 = vand.u32 %v173, 2147483648
    %v188 = vor.u32 1.1754944e-38, %v187
    %v189 = vsel %vm186, %v188, %v184
    %v190 = vrcp.pop %v175
    %v191 = vmul.f32 %v175, %v190
    %v192 = vsub.f32 1.0, %v191
    %v193 = vmul.f32 %v190, %v192
    %v194 = vadd.f32 %v190, %v193
    %vm195 = vweird.f32 %v175
    %vm196 = vweird.f32 %v190
    %vm197 = vmor %vm195, %vm196
    %v198 = vsel %vm197, %v190, %v194
    %v199 = vand.u32 2147483647, %v175
    %vm200 = vcmp.eq.f32.partialorder %v199, 8.507059e+37
    %v201 = vand.u32 %v175, 2147483648
    %v202 = vor.u32 1.1754944e-38, %v201
    %v203 = vsel %vm200, %v202, %v198
    %v204 = vmul.f32 %v169, %v189
    %v205 = vmul.f32 %v171, %v203
    %206 = vst [vmem:[#allocation8] sm:$0xff] %v204
    %207 = vst [vmem:[#allocation8 + $0x18] sm:$0xff] %v205
    %208 = vmax.xlane.f32.xlu0 %v144
    %v209 = vpop.xlane.xlu0 %208
    %210 = vmax.xlane.f32.xlu0 %v146
    %v211 = vpop.xlane.xlu0 %210
    %v212 = vsub.f32 %v144, %v209
    %v213 = vsub.f32 %v146, %v211
    %v214 = vmul.f32 %v212, 1.442695
    %v215 = vpow.pop %v214
    %v216 = vmul.f32 %v213, 1.442695
    %v217 = vpow.pop %v216
    %218 = vadd.xlane.f32.xlu0 %v215
    %v219 = vpop.xlane.xlu0 %218
    %220 = vadd.xlane.f32.xlu0 %v217
    %v221 = vpop.xlane.xlu0 %220
    %v222 = vrcp.pop %v219
    %v223 = vmul.f32 %v219, %v222
    %v224 = vsub.f32 1.0, %v223
    %v225 = vmul.f32 %v222, %v224
    %v226 = vadd.f32 %v222, %v225
    %vm227 = vweird.f32 %v219
    %vm228 = vweird.f32 %v222
    %vm229 = vmor %vm227, %vm228
    %v230 = vsel %vm229, %v222, %v226
    %v231 = vand.u32 2147483647, %v219
    %vm232 = vcmp.eq.f32.partialorder %v231, 8.507059e+37
    %v233 = vand.u32 %v219, 2147483648
    %v234 = vor.u32 1.1754944e-38, %v233
    %v235 = vsel %vm232, %v234, %v230
    %v236 = vrcp.pop %v221
    %v237 = vmul.f32 %v221, %v236
    %v238 = vsub.f32 1.0, %v237
    %v239 = vmul.f32 %v236, %v238
    %v240 = vadd.f32 %v236, %v239
    %vm241 = vweird.f32 %v221
    %vm242 = vweird.f32 %v236
    %vm243 = vmor %vm241, %vm242
    %v244 = vsel %vm243, %v236, %v240
    %v245 = vand.u32 2147483647, %v221
    %vm246 = vcmp.eq.f32.partialorder %v245, 8.507059e+37
    %v247 = vand.u32 %v221, 2147483648
    %v248 = vor.u32 1.1754944e-38, %v247
    %v249 = vsel %vm246, %v248, %v244
    %v250 = vmul.f32 %v215, %v235
    %v251 = vmul.f32 %v217, %v249
    %252 = vst [vmem:[#allocation8 + $0x8] sm:$0xff] %v250
    %253 = vst [vmem:[#allocation8 + $0x20] sm:$0xff] %v251
    %254 = vmax.xlane.f32.xlu0 %v158
    %v255 = vpop.xlane.xlu0 %254
    %256 = vmax.xlane.f32.xlu0 %v160
    %v257 = vpop.xlane.xlu0 %256
    %v258 = vsub.f32 %v158, %v255
    %v259 = vsub.f32 %v160, %v257
    %v260 = vmul.f32 %v258, 1.442695
    %v261 = vpow.pop %v260
    %v262 = vmul.f32 %v259, 1.442695
    %v263 = vpow.pop %v262
    %264 = vadd.xlane.f32.xlu0 %v261
    %v265 = vpop.xlane.xlu0 %264
    %266 = vadd.xlane.f32.xlu0 %v263
    %v267 = vpop.xlane.xlu0 %266
    %v268 = vrcp.pop %v265
    %v269 = vmul.f32 %v265, %v268
    %v270 = vsub.f32 1.0, %v269
    %v271 = vmul.f32 %v268, %v270
    %v272 = vadd.f32 %v268, %v271
    %vm273 = vweird.f32 %v265
    %vm274 = vweird.f32 %v268
    %vm275 = vmor %vm273, %vm274
    %v276 = vsel %vm275, %v268, %v272
    %v277 = vand.u32 2147483647, %v265
    %vm278 = vcmp.eq.f32.partialorder %v277, 8.507059e+37
    %v279 = vand.u32 %v265, 2147483648
    %v280 = vor.u32 1.1754944e-38, %v279
    %v281 = vsel %vm278, %v280, %v276
    %v282 = vrcp.pop %v267
    %v283 = vmul.f32 %v267, %v282
    %v284 = vsub.f32 1.0, %v283
    %v285 = vmul.f32 %v282, %v284
    %v286 = vadd.f32 %v282, %v285
    %vm287 = vweird.f32 %v267
    %vm288 = vweird.f32 %v282
    %vm289 = vmor %vm287, %vm288
    %v290 = vsel %vm289, %v282, %v286
    %v291 = vand.u32 2147483647, %v267
    %vm292 = vcmp.eq.f32.partialorder %v291, 8.507059e+37
    %v293 = vand.u32 %v267, 2147483648
    %v294 = vor.u32 1.1754944e-38, %v293
    %v295 = vsel %vm292, %v294, %v290
    %v296 = vmul.f32 %v261, %v281
    %v297 = vmul.f32 %v263, %v295
    %298 = vst [vmem:[#allocation8 + $0x10] sm:$0xff] %v296
    %299 = vst [vmem:[#allocation8 + $0x28] sm:$0xff] %v297
    // Predicated region
    $region26: #{tpu_custom_call.1} parent=1 // pred_check
      _
    $region27: #{tpu_custom_call.1} parent=1 // pred_check_branch
      %301 = sbr.rel (0) target = $region29
    $region28: #{tpu_custom_call.1} parent=1 // pred_region
      %303 = vsyncadd [#allocation4], 0
      %s304 = sshll.u32 [#allocation8], 4
      %s305 = int_to_ptr.vmem [resolvable:$true] %s304
      %s306 = sshll.u32 %s3, 4
      %s307 = int_to_ptr.hbm [resolvable:$true] %s306
      %312 = dma.vmem_to_hbm [thread:$0]  %s305, 768, %s307, [#allocation4], 384, 384, 24
    $region29: #{tpu_custom_call.1} parent=1 // pred_fallthru
      _
    // Predicated region
    $region30: #{tpu_custom_call.1} parent=1 // pred_check
      _
    $region31: #{tpu_custom_call.1} parent=1 // pred_check_branch
      %314 = sbr.rel (0) target = $region33
    $region32: #{tpu_custom_call.1} parent=1 // pred_region
      %316 = dma.done [#allocation4], 768
    $region33: #{tpu_custom_call.1} parent=1 // pred_fallthru
      _
    %317 = vsyncpa [#allocation3], 1
    %318 = vsyncpa [#allocation6], 1
    %319 = vsyncpa [#allocation4], 1

</llo_original>
